<compile_context>
chip_gen: v6e
topology: v6e:2x2x1
jax: 0.10.0
libtpu: 0.0.40
codegen_flags: <defaults>
</compile_context>

<pallas_src>
import math

import jax
import jax.numpy as jnp
from jax.experimental import pallas as pl
from jax.experimental.pallas import tpu as pltpu


def _total_vmem_bytes():
    try:
        return int(pltpu.get_tpu_info().vmem_capacity_bytes)
    except Exception:
        return 64 << 20  # conservative fallback (v7x per-TC VMEM)


_TOTAL_VMEM_BYTES = _total_vmem_bytes()
# Budget for the sum of all double-buffered tiles of one pallas_call.
_VMEM_BUDGET_BYTES = max(4 << 20, _TOTAL_VMEM_BYTES // 8)
# Scoped-VMEM limit handed to the compiler (headroom above the tile budget).
_VMEM_LIMIT_BYTES = min(_TOTAL_VMEM_BYTES, max(32 << 20, _TOTAL_VMEM_BYTES // 2))


def _sublane_multiple(dtype):
    # dtype-native packed-sublane multiple: 8 (f32) / 16 (bf16) / 32 (int8).
    return max(8, 32 // jnp.dtype(dtype).itemsize)


def _plan_tiles(n_rows, feat, dtype):
    """Pick (row_blk, f_blk) for an add with one (row_blk, f_blk) operand, one
    (1, f_blk) operand and one (row_blk, f_blk) output, all double-buffered, so the
    total stays under _VMEM_BUDGET_BYTES.  f_blk is a multiple of 128 (or full F);
    row_blk is a multiple of the dtype sublane pack (or the full row extent)."""
    itemsize = jnp.dtype(dtype).itemsize
    budget_elems = _VMEM_BUDGET_BYTES // itemsize
    sub = _sublane_multiple(dtype)
    min_rows = n_rows if n_rows < sub else sub

    def fits(rows, f):
        # 2 buffers each for: (1, f), (rows, f), (rows, f)
        return 2 * (1 + 2 * rows) * f <= budget_elems

    if fits(min_rows, feat):
        f_blk = feat
    else:
        f_blk = (budget_elems // (2 * (1 + 2 * min_rows)) // 128) * 128
        f_blk = max(128, min(f_blk, feat))

    max_rows = (budget_elems // (2 * f_blk) - 1) // 2
    if max_rows >= n_rows:
        row_blk = n_rows
    else:
        # Never round UP past the budget; f_blk was chosen so min_rows always fits.
        row_blk = max(min_rows, (max_rows // sub) * sub)
    return row_blk, f_blk


def _add_bcast_kernel(a_ref, b_ref, o_ref):
    # Elementwise (broadcast) add of lane-dense VMEM tiles; no reshape in the body.
    o_ref[...] = a_ref[...] + b_ref[...]


def _broadcast_add(x, state):
    """x: (T, *feat), state: (Ts, *feat) -> (T, Ts, F) with out[i, t] = x[i] + state[t]."""
    T = x.shape[0]
    Ts = state.shape[0]
    F = math.prod(x.shape[1:])
    itemsize = jnp.dtype(x.dtype).itemsize
    x3 = x.reshape(T, 1, F)      # free reshape; lane-dense last dim
    s2 = state.reshape(Ts, F)

    ts_blk, f_blk = _plan_tiles(Ts, F, x.dtype)
    n_j = pl.cdiv(Ts, ts_blk)
    n_f = pl.cdiv(F, f_blk)
    # Keep at least one parallel axis with extent >= 2 when possible (v7x: 2 TensorCores).
    sub = _sublane_multiple(x.dtype)
    if T == 1 and n_j == 1 and n_f == 1 and Ts >= 2 * sub:
        ts_blk = max(sub, ((Ts // 2) // sub) * sub)
        n_j = pl.cdiv(Ts, ts_blk)

    cost = pl.CostEstimate(
        flops=T * Ts * F,
        transcendentals=0,
        bytes_accessed=(T * F + Ts * F + T * Ts * F) * itemsize,
    )
    # Grid order: state-chunk axis outermost, frame axis innermost -> each state chunk is
    # DMA'd once and stays VMEM-resident while all T (1, f_blk) frame slices stream past.
    return pl.pallas_call(
        _add_bcast_kernel,
        out_shape=jax.ShapeDtypeStruct((T, Ts, F), x.dtype),
        grid=(n_j, n_f, T),
        in_specs=[
            # one flattened frame chunk of x; kernel sees (1, f_blk) (leading dim squeezed)
            pl.BlockSpec((None, 1, f_blk), lambda j, f, i: (i, 0, f)),
            # state chunk; index independent of i -> resident across the inner T loop
            pl.BlockSpec((ts_blk, f_blk), lambda j, f, i: (j, f)),
        ],
        out_specs=pl.BlockSpec((None, ts_blk, f_blk), lambda j, f, i: (i, j, f)),
        compiler_params=pltpu.CompilerParams(
            dimension_semantics=("parallel", "parallel", "parallel"),
            vmem_limit_bytes=_VMEM_LIMIT_BYTES),
        cost_estimate=cost,
    )(x3, s2)


def _state_add(x, state):
    """x: (T, *feat), state: (*feat) -> (T, F) with out[i] = x[i] + state."""
    T = x.shape[0]
    F = math.prod(x.shape[1:])
    itemsize = jnp.dtype(x.dtype).itemsize
    x2 = x.reshape(T, F)
    s2 = state.reshape(1, F)

    t_blk, f_blk = _plan_tiles(T, F, x.dtype)
    n_i = pl.cdiv(T, t_blk)
    n_f = pl.cdiv(F, f_blk)
    sub = _sublane_multiple(x.dtype)
    if n_i == 1 and n_f == 1 and T >= 2 * sub:
        t_blk = max(sub, ((T // 2) // sub) * sub)
        n_i = pl.cdiv(T, t_blk)

    cost = pl.CostEstimate(
        flops=T * F,
        transcendentals=0,
        bytes_accessed=(2 * T * F + F) * itemsize,
    )
    # Note: input_output_aliases={0: 0} would save the output HBM allocation under jit
    # with a donated input; omitted for eager use on still-live inputs (forces a copy).
    return pl.pallas_call(
        _add_bcast_kernel,
        out_shape=jax.ShapeDtypeStruct((T, F), x.dtype),
        grid=(n_f, n_i),
        in_specs=[
            pl.BlockSpec((t_blk, f_blk), lambda f, i: (i, f)),
            pl.BlockSpec((1, f_blk), lambda f, i: (0, f)),  # state resident across inner loop
        ],
        out_specs=pl.BlockSpec((t_blk, f_blk), lambda f, i: (i, f)),
        compiler_params=pltpu.CompilerParams(
            dimension_semantics=("parallel", "parallel"),
            vmem_limit_bytes=_VMEM_LIMIT_BYTES),
        cost_estimate=cost,
    )(x2, s2)


def forward_single(inputs, in_state):
    """Mirror of Identity.forward_single (decoder == identity)."""
    T = inputs.shape[0]
    if in_state.ndim == inputs.ndim:
        # in_state shape == inputs shape: each out_i = inputs[i] + in_state broadcasts
        # over the state's leading axis; cat on dim 0 -> (T*Ts, C, H, W).
        Ts = in_state.shape[0]
        out = _broadcast_add(inputs, in_state)                     # (T, Ts, F)
        out = out.reshape((T * Ts,) + inputs.shape[1:])
    else:
        # in_state shape == inputs.shape[1:]: out_i = inputs[i] + in_state -> (C, H, W),
        # cat on dim 0 -> (T*C, H, W).
        out = _state_add(inputs, in_state)                         # (T, F)
        out = out.reshape((T * inputs.shape[1],) + inputs.shape[2:])
    return out, in_state


def identity_forward(inputs_list, in_dict=None, is_train=False):
    """Mirror of Identity.forward.  Zero-state paths skip the kernel (x + 0 == x)."""
    out_feats, out_states = [], []
    if is_train:
        for v in inputs_list:
            T, C = v.shape[0], v.shape[1]
            out_feats.append(v.reshape((T * C,) + v.shape[2:]))    # free reshape
            out_states.append(jnp.zeros(v.shape[1:], v.dtype))
        return tuple(out_feats), dict(states=out_states)

    if in_dict is None or in_dict.get("states", None) is None:
        for v in inputs_list:
            T = v.shape[0]
            out = jnp.broadcast_to(v[:, None], (T, T) + v.shape[1:])
            out_feats.append(out.reshape((T * T,) + v.shape[1:]))
            out_states.append(jnp.zeros(v.shape, v.dtype))
        return tuple(out_feats), dict(states=out_states)

    in_states = in_dict["states"]
    for inputs, in_state in zip(inputs_list, in_states):
        out_feat, out_state = forward_single(inputs, in_state)
        out_feats.append(out_feat)
        out_states.append(out_state)
    return tuple(out_feats), dict(states=out_states)


def _reference_forward_single(inputs, in_state):
    outs = [inputs[i] + in_state for i in range(inputs.shape[0])]
    return jnp.concatenate(outs, axis=0), in_state


if __name__ == "__main__":
    key = jax.random.PRNGKey(0)
    k0, k1, k2, k3 = jax.random.split(key, 4)

    # Two feature levels (like an FPN pyramid), (T, C, H, W)
    x0 = jax.random.normal(k0, (2, 4, 16, 16), dtype=jnp.float32)
    x1 = jax.random.normal(k1, (2, 4, 8, 8), dtype=jnp.float32)
    inputs_list = [x0, x1]

    # --- provided-states path: exercises the broadcast Pallas kernel ---
    st = [jax.random.normal(k2, x0.shape, x0.dtype),
          jax.random.normal(k3, x1.shape, x1.dtype)]
    feats, out_dict = identity_forward(inputs_list, in_dict=dict(states=st))
    feats = jax.block_until_ready(feats)
    for x, s, f in zip(inputs_list, st, feats):
        ref, _ = _reference_forward_single(x, s)
        assert f.shape == ref.shape, (f.shape, ref.shape)
        assert jnp.allclose(f, ref, atol=1e-6), "stateful (broadcast) path mismatch"

    # --- per-frame state (shape == inputs.shape[1:]): exercises the resident-state kernel ---
    s_small = jax.random.normal(jax.random.PRNGKey(7), x0.shape[1:], x0.dtype)
    f_small, _ = forward_single(x0, s_small)
    f_small = jax.block_until_ready(f_small)
    ref_small, _ = _reference_forward_single(x0, s_small)
    assert f_small.shape == ref_small.shape, (f_small.shape, ref_small.shape)
    assert jnp.allclose(f_small, ref_small, atol=1e-6), "per-frame state path mismatch"

    # --- inference path with zero states (short-circuited, no kernel launch) ---
    feats0, _ = identity_forward(inputs_list, in_dict=None, is_train=False)
    feats0 = jax.block_until_ready(feats0)
    for x, f in zip(inputs_list, feats0):
        ref, _ = _reference_forward_single(x, jnp.zeros(x.shape, x.dtype))
        assert f.shape == ref.shape, (f.shape, ref.shape)
        assert jnp.allclose(f, ref), "zero-state inference path mismatch"

    # --- training path with zero states (short-circuited reshape) ---
    feats_tr, _ = identity_forward(inputs_list, is_train=True)
    feats_tr = jax.block_until_ready(feats_tr)
    for x, f in zip(inputs_list, feats_tr):
        ref, _ = _reference_forward_single(x, jnp.zeros(x.shape[1:], x.dtype))
        assert f.shape == ref.shape, (f.shape, ref.shape)
        assert jnp.allclose(f, ref), "train path mismatch"

    print("KERNEL_OK")
</pallas_src>

<mosaic_0001>
module attributes {stable_mosaic.version = 11 : i64} {
  func.func @_add_bcast_kernel(%arg0: i32, %arg1: i32, %arg2: i32, %arg3: memref<1x1x1024xf32, #tpu.memory_space<vmem>>, %arg4: memref<2x1024xf32, #tpu.memory_space<vmem>>, %arg5: memref<1x2x1024xf32, #tpu.memory_space<vmem>>) attributes {dimension_semantics = [#tpu.dimension_semantics<parallel>, #tpu.dimension_semantics<parallel>, #tpu.dimension_semantics<parallel>], iteration_bounds = array<i64: 1, 1, 2>, scalar_prefetch = 0 : i64, scratch_operands = 0 : i64, tpu.core_type = #tpu.core_type<tc>, window_params = [{transform_indices = @transform_0, window_bounds = array<i64: 1, 1, 1024>}, {transform_indices = @transform_1, window_bounds = array<i64: 2, 1024>}, {transform_indices = @transform_2, window_bounds = array<i64: 1, 2, 1024>}]} {
    %c0 = arith.constant 0 : index
    %c0_0 = arith.constant 0 : index
    %c0_1 = arith.constant 0 : index
    %0 = vector.load %arg3[%c0, %c0_0, %c0_1] : memref<1x1x1024xf32, #tpu.memory_space<vmem>>, vector<1x1x1024xf32>
    %1 = vector.shape_cast %0 : vector<1x1x1024xf32> to vector<1x1024xf32>
    %c0_2 = arith.constant 0 : index
    %c0_3 = arith.constant 0 : index
    %2 = vector.load %arg4[%c0_2, %c0_3] : memref<2x1024xf32, #tpu.memory_space<vmem>>, vector<2x1024xf32>
    %3 = vector.broadcast %1 : vector<1x1024xf32> to vector<2x1024xf32>
    %4 = arith.addf %3, %2 : vector<2x1024xf32>
    %c0_4 = arith.constant 0 : index
    %c0_5 = arith.constant 0 : index
    %c0_6 = arith.constant 0 : index
    %5 = vector.load %arg5[%c0_4, %c0_5, %c0_6] : memref<1x2x1024xf32, #tpu.memory_space<vmem>>, vector<1x2x1024xf32>
    %6 = vector.shape_cast %5 : vector<1x2x1024xf32> to vector<2x1024xf32>
    %7 = vector.shape_cast %4 : vector<2x1024xf32> to vector<1x2x1024xf32>
    tpu.vector_store %arg5[%c0_4, %c0_5, %c0_6], %7 {strides = array<i32>} : memref<1x2x1024xf32, #tpu.memory_space<vmem>>, vector<1x2x1024xf32>,
    return
  }
  func.func @transform_0(%arg0: i32, %arg1: i32, %arg2: i32) -> (i32, i32, i32) {
    %c0_i32 = arith.constant 0 : i32
    %c0_i32_0 = arith.constant 0 : i32
    return %arg2, %c0_i32, %arg1 : i32, i32, i32
  }
  func.func @transform_1(%arg0: i32, %arg1: i32, %arg2: i32) -> (i32, i32) {
    %c0_i32 = arith.constant 0 : i32
    return %arg0, %arg1 : i32, i32
  }
  func.func @transform_2(%arg0: i32, %arg1: i32, %arg2: i32) -> (i32, i32, i32) {
    %c0_i32 = arith.constant 0 : i32
    return %arg2, %arg0, %arg1 : i32, i32, i32
  }
}

</mosaic_0001>

<llo_original>
// kernel: tpu_custom_call.1
$region0: #{tpu_custom_call.1}
  #allocation0 [shape = 'u32[]', space=smem, size = 0x4, offset = 0x4, fixed_abs, tag = 'smem constant byte address 0x4 - core index']
  #allocation1 [shape = 'u32[144,128]{1,0:T(1,128)}', space=vmem, size = 0x12000, scoped, tag = 'internal scratch']
  %s0 = inlined_call_operand.hbm [shape: f32[2,1,1024], index: 0, kind: input, shape index: {}]
  %s1 = inlined_call_operand.hbm [shape: f32[2,1024], index: 1, kind: input, shape index: {}]
  %s2 = inlined_call_operand.hbm [shape: f32[2,2,1024], index: 2, kind: output, shape index: {}]
  %s3 = sld [smem:[#allocation0]]
  $region49: #{tpu_custom_call.1} parent=0
    _
  %s5 = ssub.s32 1, %s3
  %s6 = scalar_select 0, %s5, %s3
  $region1: #{tpu_custom_call.1} parent=0
    #allocation2 [shape = 'u8[8192]{0}', space=vmem, size = 0x2000, scoped, tag = 'input window, operand 0']
    #allocation3 [shape = 's32[2]{0}', space=sflag, size = 0x8, scoped, tag = 'scoped memory for tpu_custom_call.1']
    #allocation4 [shape = 's32[2]{0}', space=sflag, size = 0x8, scoped, tag = 'scoped memory for tpu_custom_call.1']
    #allocation5 [shape = 'u8[8192]{0}', space=vmem, size = 0x2000, scoped, tag = 'input window, operand 1, single buffered']
    #allocation6 [shape = 's32[1]{0}', space=sflag, size = 0x4, scoped, tag = 'scoped memory for tpu_custom_call.1']
    #allocation7 [shape = 'u8[16384]{0}', space=vmem, size = 0x4000, scoped, tag = 'output window, operand 0']
    %7 = vsyncpa [#allocation3], 0
    %s8 = scalar_lea.sflag [#allocation3], 1
    %9 = vsyncpa %s8, 0
    %10 = vsyncpa [#allocation6], 0
    %11 = vsyncpa [#allocation4], 0
    %s12 = scalar_lea.sflag [#allocation4], 1
    %13 = vsyncpa %s12, 0
    loop: start=0, step=1, limit=4
    $region2: #{tpu_custom_call.1} parent=1 // loop_pre_header
      _
    $region3: #{tpu_custom_call.1} parent=1 // loop_header
      %s15 = sphi 0, %s19
      %p16 = scmp.ge.s32.totalorder %s15, 4
      %s22 = sphi 0, %s41
      %s23 = sphi 0, %s37
      %s24 = sphi 0, %s33
      %s25 = sphi 0, %s22
      %s26 = sphi 0, %s23
      %s27 = sphi 0, %s24
      %s28 = sphi 0, %s25
      %s29 = sphi 0, %s26
      %s30 = sphi 0, %s27
      %s46 = sphi 0, %s48
      %s49 = sphi 0, %s46
      %s50 = sphi 0, %s49
      %s66 = sphi 0, %s50
      %s74 = sphi 0, %s76
      %s77 = sphi 0, %s74
      %s78 = sphi 0, %s77
      %s94 = sphi 0, %s78
      %s104 = sphi 0, %s106
      %s107 = sphi 0, %s104
      %s108 = sphi 0, %s107
      %s124 = sphi 0, %s108
    $region4: #{tpu_custom_call.1} parent=1 // loop_header_branch
      %18 = sbr.rel (%p16) target = $region8
    $region5: #{tpu_custom_call.1} parent=1 // loop_body
      %s20 = ssub.s32 %s15, 1
      %s21 = ssub.s32 %s15, 2
      %s31 = sadd.s32 1, %s24
      %p32 = scmp.ge.s32.totalorder %s31, 2
      %s33 = scalar_select %p32, 0, %s31
      %s34 = sadd.s32 1, %s23
      %s35 = scalar_select %p32, %s34, %s23
      %p36 = scmp.ge.s32.totalorder %s35, 1
      %s37 = scalar_select %p36, 0, %s35
      %s38 = sadd.s32 1, %s22
      %s39 = scalar_select %p36, %s38, %s22
      %p40 = scmp.ge.s32.totalorder %s39, 1
      %s41 = scalar_select %p40, 0, %s39
      %s42 = ssub.s32 %s24, %s33
      %s43 = ssub.s32 %s23, %s37
      %s44 = sor.u32 %s42, %s43
      %p45 = scmp.eq.s32.totalorder %s44, 0
      %s47 = sadd.s32 %s46, 1
      %s48 = scalar_select %p45, %s46, %s47
      %p51 = pneg %p45
      %p52 = scmp.eq.s32.totalorder %s15, 1
      %p53 = por %p51, %p52
      %p54 = scmp.ne.s32.totalorder %s46, %s49
      %p55 = scmp.eq.s32.totalorder %s15, 0
      %p56 = por %p54, %p55
      %p57 = scmp.ne.s32.totalorder %s46, %s49
      %p58 = scmp.eq.s32.totalorder %s20, 1
      %p59 = por %p57, %p58
      %p60 = scmp.ne.s32.totalorder %s49, %s50
      %p61 = scmp.eq.s32.totalorder %s20, 0
      %p62 = por %p60, %p61
      %p63 = scmp.ne.s32.totalorder %s49, %s50
      %p64 = scmp.eq.s32.totalorder %s21, 1
      %p65 = por %p63, %p64
      %p67 = scmp.ne.s32.totalorder %s50, %s66
      %p68 = scmp.eq.s32.totalorder %s21, 0
      %p69 = por %p67, %p68
      %s70 = ssub.s32 %s22, %s41
      %s71 = ssub.s32 %s23, %s37
      %s72 = sor.u32 %s70, %s71
      %p73 = scmp.eq.s32.totalorder %s72, 0
      %s75 = sadd.s32 %s74, 1
      %s76 = scalar_select %p73, %s74, %s75
      %p79 = pneg %p73
      %p80 = scmp.eq.s32.totalorder %s15, 1
      %p81 = por %p79, %p80
      %p82 = scmp.ne.s32.totalorder %s74, %s77
      %p83 = scmp.eq.s32.totalorder %s15, 0
      %p84 = por %p82, %p83
      %p85 = scmp.ne.s32.totalorder %s74, %s77
      %p86 = scmp.eq.s32.totalorder %s20, 1
      %p87 = por %p85, %p86
      %p88 = scmp.ne.s32.totalorder %s77, %s78
      %p89 = scmp.eq.s32.totalorder %s20, 0
      %p90 = por %p88, %p89
      %p91 = scmp.ne.s32.totalorder %s77, %s78
      %p92 = scmp.eq.s32.totalorder %s21, 1
      %p93 = por %p91, %p92
      %p95 = scmp.ne.s32.totalorder %s78, %s94
      %p96 = scmp.eq.s32.totalorder %s21, 0
      %p97 = por %p95, %p96
      %s98 = ssub.s32 %s24, %s33
      %s99 = ssub.s32 %s22, %s41
      %s100 = sor.u32 %s98, %s99
      %s101 = ssub.s32 %s23, %s37
      %s102 = sor.u32 %s100, %s101
      %p103 = scmp.eq.s32.totalorder %s102, 0
      %s105 = sadd.s32 %s104, 1
      %s106 = scalar_select %p103, %s104, %s105
      %p109 = pneg %p103
      %p110 = scmp.eq.s32.totalorder %s15, 1
      %p111 = por %p109, %p110
      %p112 = scmp.ne.s32.totalorder %s104, %s107
      %p113 = scmp.eq.s32.totalorder %s15, 0
      %p114 = por %p112, %p113
      %p115 = scmp.ne.s32.totalorder %s104, %s107
      %p116 = scmp.eq.s32.totalorder %s20, 1
      %p117 = por %p115, %p116
      %p118 = scmp.ne.s32.totalorder %s107, %s108
      %p119 = scmp.eq.s32.totalorder %s20, 0
      %p120 = por %p118, %p119
      %p121 = scmp.ne.s32.totalorder %s107, %s108
      %p122 = scmp.eq.s32.totalorder %s21, 1
      %p123 = por %p121, %p122
      %p125 = scmp.ne.s32.totalorder %s108, %s124
      %p126 = scmp.eq.s32.totalorder %s21, 0
      %p127 = por %p125, %p126
      %p128 = scmp.le.s32.totalorder 1, %s15
      %p129 = scmp.lt.s32.totalorder %s15, 3
      %p130 = pnand %p128, %p129
      %p131 = pneg %p130
      // Predicated region
      $region9: #{tpu_custom_call.1} parent=5 // pred_check
        _
      $region10: #{tpu_custom_call.1} parent=5 // pred_check_branch
        %133 = sbr.rel (%p130) target = $region12
      $region11: #{tpu_custom_call.1} parent=5 // pred_region
        %s134 = ssub.s32 %s15, 1
        // Predicated region
        $region13: #{tpu_custom_call.1} parent=11 // pred_check
          %p135 = pneg %p90
        $region14: #{tpu_custom_call.1} parent=11 // pred_check_branch
          %137 = sbr.rel (%p135) target = $region16
        $region15: #{tpu_custom_call.1} parent=11 // pred_region
          %s138 = smul.u32 8, %s26
          %s140 = ssub.s32 256, 256
          %141 = vsyncadd [#allocation6], %s140
          %s142 = smul.addr %s25, 8
          %s143 = sadd.s32 %s138, %s142
          %s144 = smul.addr %s143, 32
          %s145 = scalar_lea.hbm %s1, %s144
          %s147 = sshll.u32 [#allocation5], 4
          %s148 = int_to_ptr.vmem [resolvable:$true] %s147
          %150 = dma.hbm_to_vmem [thread:$0]  %s145, 256, %s148, [#allocation6]
        $region16: #{tpu_custom_call.1} parent=11 // pred_fallthru
          _
      $region12: #{tpu_custom_call.1} parent=5 // pred_fallthru
        _
      %p151 = scmp.lt.s32.totalorder %s15, 2
      // Predicated region
      $region17: #{tpu_custom_call.1} parent=5 // pred_check
        %p152 = pneg %p151
      $region18: #{tpu_custom_call.1} parent=5 // pred_check_branch
        %154 = sbr.rel (%p152) target = $region20
      $region19: #{tpu_custom_call.1} parent=5 // pred_region
        // Predicated region
        $region21: #{tpu_custom_call.1} parent=19 // pred_check
          %p155 = pneg %p56
        $region22: #{tpu_custom_call.1} parent=19 // pred_check_branch
          %157 = sbr.rel (%p155) target = $region24
        $region23: #{tpu_custom_call.1} parent=19 // pred_region
          %s158 = sand.u32 %s46, 1
          %s159 = scalar_lea.sflag [#allocation3], %s158
          %s160 = sand.u32 %s46, 1
          %s161 = smul.addr %s160, 8
          %s162 = scalar_lea.vmem [#allocation2], %s161
          %s163 = smul.u32 8, %s23
          %s165 = ssub.s32 128, 128
          %166 = vsyncadd %s159, %s165
          %s167 = smul.addr %s24, 8
          %s168 = sadd.s32 %s163, %s167
          %s169 = smul.addr %s168, 16
          %s170 = scalar_lea.hbm %s0, %s169
          %s172 = sshll.u32 %s162, 4
          %s173 = int_to_ptr.vmem [resolvable:$true] %s172
          %175 = dma.hbm_to_vmem [thread:$0]  %s170, 128, %s173, %s159
        $region24: #{tpu_custom_call.1} parent=19 // pred_fallthru
          _
      $region20: #{tpu_custom_call.1} parent=5 // pred_fallthru
        _
      %p176 = scmp.le.s32.totalorder 1, %s15
      %p177 = scmp.lt.s32.totalorder %s15, 3
      %p178 = pnand %p176, %p177
      %p179 = pneg %p178
      // Predicated region
      $region25: #{tpu_custom_call.1} parent=5 // pred_check
        _
      $region26: #{tpu_custom_call.1} parent=5 // pred_check_branch
        %181 = sbr.rel (%p178) target = $region28
      $region27: #{tpu_custom_call.1} parent=5 // pred_region
        %s182 = ssub.s32 %s15, 1
        %s183 = sand.u32 %s49, 1
        %s184 = scalar_lea.sflag [#allocation3], %s183
        %s185 = sand.u32 %s49, 1
        %s186 = smul.addr %s185, 8
        %s187 = scalar_lea.vmem [#allocation2], %s186
        // Predicated region
        $region29: #{tpu_custom_call.1} parent=27 // pred_check
          %p188 = pneg %p62
        $region30: #{tpu_custom_call.1} parent=27 // pred_check_branch
          %190 = sbr.rel (%p188) target = $region32
        $region31: #{tpu_custom_call.1} parent=27 // pred_region
          %191 = dma.done %s184, 128
        $region32: #{tpu_custom_call.1} parent=27 // pred_fallthru
          _
        // Predicated region
        $region33: #{tpu_custom_call.1} parent=27 // pred_check
          %p192 = pneg %p90
        $region34: #{tpu_custom_call.1} parent=27 // pred_check_branch
          %194 = sbr.rel (%p192) target = $region36
        $region35: #{tpu_custom_call.1} parent=27 // pred_region
          %195 = dma.done [#allocation6], 256
        $region36: #{tpu_custom_call.1} parent=27 // pred_fallthru
          _
        %s196 = sand.u32 %s49, 1
        %s197 = scalar_lea.sflag [#allocation3], %s196
        %s198 = sand.u32 %s49, 1
        %s199 = smul.addr %s198, 8
        %s200 = scalar_lea.vmem [#allocation2], %s199
        %p201 = pneg %p62
        %p202 = pneg %p59
        %p203 = pneg %p90
        %p204 = pneg %p87
        %p205 = pneg %p120
        %p206 = pneg %p117
        %s207 = sand.u32 %s107, 1
        %s208 = scalar_lea.sflag [#allocation4], %s207
        %s209 = sand.u32 %s107, 1
        %s210 = smul.addr %s209, 16
        %s211 = scalar_lea.vmem [#allocation7], %s210
        %s212 = smul.u32 8, %s26
        %s213 = smul.u32 8, %s26
        %s214 = smul.u32 8, %s26
        %v215 = vld [vmem:[%s187] sm:$0xff]
        %v216 = vld [vmem:[#allocation5] sm:$0xff]
        %v217 = vld [vmem:[#allocation5 + $0x8] sm:$0xff]
        %v219 = vlaneseq
        %v220 = vshrl.u32 %v219, 7
        %v221 = vsub.s32 0, %v220
        %v222 = vrot.slane %v215, %v221
        %v223 = vlaneseq
        %v224 = vshrl.u32 %v223, 7
        %v225 = vsub.s32 1, %v224
        %v226 = vrot.slane %v215, %v225
        %v227 = vlaneseq
        %v228 = vshrl.u32 %v227, 7
        %v229 = vsub.s32 2, %v228
        %v230 = vrot.slane %v215, %v229
        %v231 = vlaneseq
        %v232 = vshrl.u32 %v231, 7
        %v233 = vsub.s32 3, %v232
        %v234 = vrot.slane %v215, %v233
        %v235 = vlaneseq
        %v236 = vshrl.u32 %v235, 7
        %v237 = vsub.s32 4, %v236
        %v238 = vrot.slane %v215, %v237
        %v239 = vlaneseq
        %v240 = vshrl.u32 %v239, 7
        %v241 = vsub.s32 5, %v240
        %v242 = vrot.slane %v215, %v241
        %v243 = vlaneseq
        %v244 = vshrl.u32 %v243, 7
        %v245 = vsub.s32 6, %v244
        %v246 = vrot.slane %v215, %v245
        %v247 = vlaneseq
        %v248 = vshrl.u32 %v247, 7
        %v249 = vsub.s32 7, %v248
        %v250 = vrot.slane %v215, %v249
        %v261 = vcombine.high %v216, %v216
        %v263 = vunpack.c.l.s4 1983009808
        %v264 = vunpack.c.0.s8 %v263
        %v265 = vlaneseq
        %v266 = vshrl.u32 %v265, 7
        %v267 = vsub.s32 %v264, %v266
        %v268 = vrot.slane %v216, %v267
        %v270 = vunpack.c.l.s4 1983009808
        %v271 = vunpack.c.0.s8 %v270
        %v272 = vlaneseq
        %v273 = vshrl.u32 %v272, 7
        %v274 = vsub.s32 %v271, %v273
        %v275 = vrot.slane %v261, %v274
        %v276 = vcombine.high %v268, %v268
        %v277 = vcombine.high %v275, %v275
        %v278 = vcombine.high %v217, %v217
        %v280 = vunpack.c.l.s4 1983009808
        %v281 = vunpack.c.0.s8 %v280
        %v282 = vlaneseq
        %v283 = vshrl.u32 %v282, 7
        %v284 = vsub.s32 %v281, %v283
        %v285 = vrot.slane %v217, %v284
        %v287 = vunpack.c.l.s4 1983009808
        %v288 = vunpack.c.0.s8 %v287
        %v289 = vlaneseq
        %v290 = vshrl.u32 %v289, 7
        %v291 = vsub.s32 %v288, %v290
        %v292 = vrot.slane %v278, %v291
        %v293 = vcombine.high %v285, %v285
        %v294 = vcombine.high %v292, %v292
        %v303 = vadd.f32 %v222, %v268
        %v304 = vadd.f32 %v226, %v276
        %v305 = vadd.f32 %v230, %v275
        %v306 = vadd.f32 %v234, %v277
        %v307 = vadd.f32 %v238, %v285
        %v308 = vadd.f32 %v242, %v293
        %v309 = vadd.f32 %v246, %v292
        %v310 = vadd.f32 %v250, %v294
        %v319 = vcombine.low %v303, %v304
        %v320 = vcombine.low %v305, %v306
        %v322 = vunpack.c.l.s4 1983009808
        %v323 = vunpack.c.0.s8 %v322
        %v324 = vlaneseq
        %v325 = vshrl.u32 %v324, 7
        %v326 = vsub.s32 %v323, %v325
        %v327 = vrot.slane %v319, %v326
        %v329 = vunpack.c.l.s4 1983009808
        %v330 = vunpack.c.0.s8 %v329
        %v331 = vlaneseq
        %v332 = vshrl.u32 %v331, 7
        %v333 = vsub.s32 %v330, %v332
        %v334 = vrot.slane %v320, %v333
        %v335 = vcombine.low %v327, %v334
        %v336 = vcombine.low %v307, %v308
        %v337 = vcombine.low %v309, %v310
        %v339 = vunpack.c.l.s4 1983009808
        %v340 = vunpack.c.0.s8 %v339
        %v341 = vlaneseq
        %v342 = vshrl.u32 %v341, 7
        %v343 = vsub.s32 %v340, %v342
        %v344 = vrot.slane %v336, %v343
        %v346 = vunpack.c.l.s4 1983009808
        %v347 = vunpack.c.0.s8 %v346
        %v348 = vlaneseq
        %v349 = vshrl.u32 %v348, 7
        %v350 = vsub.s32 %v347, %v349
        %v351 = vrot.slane %v337, %v350
        %v352 = vcombine.low %v344, %v351
        %355 = vst [vmem:[%s211] sm:$0xff] %v335
        %356 = vst [vmem:[%s211 + $0x8] sm:$0xff] %v352
        %s357 = sand.u32 %s107, 1
        %s358 = scalar_lea.sflag [#allocation4], %s357
        %s359 = sand.u32 %s107, 1
        %s360 = smul.addr %s359, 16
        %s361 = scalar_lea.vmem [#allocation7], %s360
        // Predicated region
        $region37: #{tpu_custom_call.1} parent=27 // pred_check
          %p362 = pneg %p117
        $region38: #{tpu_custom_call.1} parent=27 // pred_check_branch
          %364 = sbr.rel (%p362) target = $region40
        $region39: #{tpu_custom_call.1} parent=27 // pred_region
          %s365 = smul.u32 8, %s26
          %s367 = ssub.s32 256, 256
          %368 = vsyncadd %s358, %s367
          %s369 = smul.addr %s25, 8
          %s370 = sadd.s32 %s365, %s369
          %s371 = smul.addr %s27, 8
          %s372 = sadd.s32 %s370, %s371
          %s373 = smul.addr %s372, 32
          %s374 = scalar_lea.hbm %s2, %s373
          %s376 = sshll.u32 %s361, 4
          %s377 = int_to_ptr.vmem [resolvable:$true] %s376
          %379 = dma.vmem_to_hbm [thread:$0]  %s377, 256, %s374, %s358
        $region40: #{tpu_custom_call.1} parent=27 // pred_fallthru
          _
      $region28: #{tpu_custom_call.1} parent=5 // pred_fallthru
        _
      %p380 = scmp.le.s32.totalorder 2, %s15
      // Predicated region
      $region41: #{tpu_custom_call.1} parent=5 // pred_check
        %p381 = pneg %p380
      $region42: #{tpu_custom_call.1} parent=5 // pred_check_branch
        %383 = sbr.rel (%p381) target = $region44
      $region43: #{tpu_custom_call.1} parent=5 // pred_region
        %s384 = ssub.s32 %s15, 2
        // Predicated region
        $region45: #{tpu_custom_call.1} parent=43 // pred_check
          %p385 = pneg %p123
        $region46: #{tpu_custom_call.1} parent=43 // pred_check_branch
          %387 = sbr.rel (%p385) target = $region48
        $region47: #{tpu_custom_call.1} parent=43 // pred_region
          %s388 = sand.u32 %s108, 1
          %s389 = scalar_lea.sflag [#allocation4], %s388
          %s390 = sand.u32 %s108, 1
          %s391 = smul.addr %s390, 16
          %s392 = scalar_lea.vmem [#allocation7], %s391
          %393 = dma.done %s389, 256
        $region48: #{tpu_custom_call.1} parent=43 // pred_fallthru
          _
      $region44: #{tpu_custom_call.1} parent=5 // pred_fallthru
        _
    $region6: #{tpu_custom_call.1} parent=1 // loop_footer
      %s19 = sadd.s32 1, %s15
    $region7: #{tpu_custom_call.1} parent=1 // loop_footer_branch
      %14 = sbr.rel target = $region3
    $region8: #{tpu_custom_call.1} parent=1 // loop_exit
      _
    %394 = vsyncpa [#allocation3], 1
    %s395 = scalar_lea.sflag [#allocation3], 1
    %396 = vsyncpa %s395, 1
    %397 = vsyncpa [#allocation6], 1
    %398 = vsyncpa [#allocation4], 1
    %s399 = scalar_lea.sflag [#allocation4], 1
    %400 = vsyncpa %s399, 1

</llo_original>
